<compile_context>
chip_gen: v5e
topology: v5e:2x2
jax: 0.10.0
libtpu: 0.0.40
codegen_flags: <defaults>
</compile_context>

<pallas_src>
import jax
import jax.numpy as jnp
from jax.experimental import pallas as pl
from jax.experimental.pallas import tpu as pltpu


def _multi_lora_kernel(adapter_ids_ref,   # scalar-prefetch (SMEM); used by index_maps only
                       x_ref,             # (1, S, tk)
                       w_ref,             # (tk, tn)     pre-transposed base-weight tile
                       bias_ref,          # (1, tn)
                       a_ref,             # (1, tk, R)   adapter A tile (pre-transposed, unpadded)
                       b_ref,             # (1, R, tn)   adapter B tile (pre-transposed, unpadded)
                       out_ref,           # (1, S, tn)
                       acc_ref,           # (S, tn) f32 scratch -- base accumulator
                       mid_ref):          # (S, R)  f32 scratch -- x @ A accumulator
    del adapter_ids_ref
    n = pl.program_id(1)
    k = pl.program_id(2)
    nk = pl.num_programs(2)

    x = x_ref[0]                                                       # (S, tk)

    # ---- Base GEMM partial: (S, tk) @ (tk, tn), accumulated in f32. --------
    base_part = jnp.dot(x, w_ref[...], preferred_element_type=jnp.float32)

    @pl.when(k == 0)
    def _():                       # first K tile: direct write, no zero-fill
        acc_ref[...] = base_part

    @pl.when(k > 0)
    def _():
        acc_ref[...] += base_part

    # ---- LoRA-A partial: only on the FIRST N tile of each batch element. ---
    # mid scratch persists across the n axis (n is "arbitrary", never
    # core-parallel), so n > 0 reuses it instead of recomputing x @ A.
    @pl.when(n == 0)
    def _():
        a_part = jnp.dot(x, a_ref[0], preferred_element_type=jnp.float32)

        @pl.when(k == 0)
        def _():
            mid_ref[...] = a_part

        @pl.when(k > 0)
        def _():
            mid_ref[...] += a_part

    # ---- Finalize once the K contraction is complete. ----------------------
    @pl.when(k == nk - 1)
    def _():
        lora = jnp.dot(mid_ref[...].astype(b_ref.dtype), b_ref[0],
                       preferred_element_type=jnp.float32)             # (S, tn)
        out_ref[0] = (acc_ref[...] + bias_ref[...] + lora).astype(out_ref.dtype)


def _pick_tile(dim, target, align=128):
    """Largest multiple of `align` <= target that divides `dim`; full dim for
    small / unaligned dims (block == full dim always satisfies the (8,128) rule)."""
    if dim % align != 0 or dim <= align:
        return dim
    best = align
    t = align
    while t <= min(target, dim):
        if dim % t == 0:
            best = t
        t += align
    return best


def multi_lora_forward(x, adapter_ids, w_base, bias, lora_a, lora_b,
                       *, tn_target=256, tk_target=512):
    """x: (B, S, D_in); adapter_ids: (B,) int; w_base: (D_out, D_in);
       bias: (D_out,); lora_a: (L, R, D_in); lora_b: (L, D_out, R)."""
    B, S, D_in = x.shape
    D_out = w_base.shape[0]
    L, R, _ = lora_a.shape

    tn = _pick_tile(D_out, tn_target)
    tk = _pick_tile(D_in, tk_target)
    n_n = D_out // tn
    n_k = D_in // tk

    # Wrapper-side layout plumbing (no in-kernel transposes). Rank left unpadded.
    w_t = jnp.transpose(w_base)                 # (D_in, D_out)
    a_t = jnp.swapaxes(lora_a, 1, 2)            # (L, D_in, R)
    b_t = jnp.swapaxes(lora_b, 1, 2)            # (L, R, D_out)
    bias2d = bias.reshape(1, D_out)
    adapter_ids = adapter_ids.astype(jnp.int32)

    # TODO(synk): decode-style (S == 1) workloads should flatten (B, S) into a
    # single M dim and group rows by adapter (MoE grouped-GEMM with scalar-
    # prefetched group offsets) so the base weight is streamed from HBM once
    # total and the MXU M dimension is filled; that restructure trades away the
    # batch-"parallel" megacore axis used here and needs row sorting/offsets
    # in the wrapper.

    def x_map(b, n, k, aid):
        return (b, 0, k)

    def w_map(b, n, k, aid):
        return (k, n)

    def bias_map(b, n, k, aid):
        return (0, n)

    def a_map(b, n, k, aid):
        # x @ A is only consumed on the first N tile; pin the block index for
        # n > 0 so Pallas skips the redundant adapter-A re-DMA there.
        return (aid[b], jnp.where(n == 0, k, 0), 0)

    def b_map(b, n, k, aid):
        return (aid[b], 0, n)

    def out_map(b, n, k, aid):
        return (b, 0, n)

    grid_spec = pltpu.PrefetchScalarGridSpec(
        num_scalar_prefetch=1,
        grid=(B, n_n, n_k),
        in_specs=[
            pl.BlockSpec((1, S, tk), x_map),       # x
            pl.BlockSpec((tk, tn), w_map),         # W^T tile
            pl.BlockSpec((1, tn), bias_map),       # bias tile
            pl.BlockSpec((1, tk, R), a_map),       # A^T[adapter] tile (unpadded rank)
            pl.BlockSpec((1, R, tn), b_map),       # B^T[adapter] tile (unpadded rank)
        ],
        out_specs=pl.BlockSpec((1, S, tn), out_map),
        scratch_shapes=[
            pltpu.VMEM((S, tn), jnp.float32),      # base accumulator
            pltpu.VMEM((S, R), jnp.float32),       # LoRA-A accumulator
        ],
    )

    # VMEM budget: double-buffered blocks + scratch, with headroom; capped at
    # 48 MiB so v7x (64 MiB physical per TC) keeps compiler headroom.
    itemsize = x.dtype.itemsize
    block_bytes = (
        2 * (S * tk * itemsize                      # x block
             + tk * tn * w_t.dtype.itemsize         # W^T tile
             + tn * bias2d.dtype.itemsize           # bias tile
             + tk * R * a_t.dtype.itemsize          # A^T tile
             + R * tn * b_t.dtype.itemsize)         # B^T tile
        + 2 * (S * tn * itemsize)                   # output block
        + 4 * (S * tn + S * R))                     # f32 scratch
    vmem_limit = int(min(48 * 2**20, max(32 * 2**20, 2 * block_bytes)))

    flops = (2 * B * S * D_in * D_out               # base GEMM
             + 2 * B * S * D_in * R                 # x @ A (once per batch element)
             + 2 * B * S * R * D_out)               # (x @ A) @ B
    bytes_accessed = int(
        B * S * D_in * itemsize * n_n                        # x re-streamed per N tile
        + B * D_in * D_out * w_t.dtype.itemsize              # weight streamed per batch elem
        + D_out * bias2d.dtype.itemsize
        + B * (D_in * R + R * D_out) * a_t.dtype.itemsize    # unpadded adapter traffic
        + B * S * D_out * itemsize)                          # output write

    return pl.pallas_call(
        _multi_lora_kernel,
        out_shape=jax.ShapeDtypeStruct((B, S, D_out), x.dtype),
        grid_spec=grid_spec,
        compiler_params=pltpu.CompilerParams(
            # batch is megacore-shardable; n must stay "arbitrary" because the
            # x@A scratch computed at n == 0 is reused for n > 0 on the same core.
            dimension_semantics=("parallel", "arbitrary", "arbitrary"),
            vmem_limit_bytes=vmem_limit,
        ),
        cost_estimate=pl.CostEstimate(
            flops=flops, transcendentals=0, bytes_accessed=bytes_accessed),
    )(adapter_ids, x, w_t, bias2d, a_t, b_t)


def _reference(x, adapter_ids, w_base, bias, lora_a, lora_b):
    base = jnp.einsum("bsd,od->bso", x, w_base) + bias[None, None, :]
    a_sel = lora_a[adapter_ids]            # (B, R, D_in)
    b_sel = lora_b[adapter_ids]            # (B, D_out, R)
    mid = jnp.einsum("bsd,brd->bsr", x, a_sel)
    lora = jnp.einsum("bsr,bor->bso", mid, b_sel)
    return (base + lora).astype(x.dtype)


if __name__ == "__main__":
    # Small, deterministic problem consistent with a MultiLoraModule wrapping
    # nn.Linear(in_features=32, out_features=32), max_lora_rank=8, max_loras=2
    # (max_loras+1 = 3 adapter slots; slot 0 is the "no adapter" slot).
    key = jax.random.PRNGKey(0)
    k_x, k_w, k_bias, k_a, k_b = jax.random.split(key, 5)

    batch, seq = 2, 8
    in_features, out_features = 32, 32
    rank = 8
    max_loras = 2
    n_slots = max_loras + 1

    dtype = jnp.float32
    x = jax.random.normal(k_x, (batch, seq, in_features), dtype=dtype)
    w_base = jax.random.normal(k_w, (out_features, in_features), dtype=dtype) * 0.1
    bias = jax.random.normal(k_bias, (out_features,), dtype=dtype) * 0.1
    # Slot 0 zeroed out ("base-only" adapter); real adapters in 1..max_loras.
    lora_a = jax.random.normal(k_a, (n_slots, rank, in_features), dtype=dtype) * 0.1
    lora_a = lora_a.at[0].set(0.0)
    lora_b = jax.random.normal(k_b, (n_slots, out_features, rank), dtype=dtype) * 0.1
    lora_b = lora_b.at[0].set(0.0)

    adapter_ids = jnp.array([1, 2], dtype=jnp.int32)

    fwd = jax.jit(multi_lora_forward)
    out = fwd(x, adapter_ids, w_base, bias, lora_a, lora_b)
    jax.block_until_ready(out)

    ref = _reference(x, adapter_ids, w_base, bias, lora_a, lora_b)
    assert out.shape == (batch, seq, out_features)
    assert out.dtype == x.dtype
    assert jnp.allclose(out, ref, atol=1e-4, rtol=1e-4)

    print("KERNEL_OK")
</pallas_src>

<mosaic_0001>
module attributes {stable_mosaic.version = 11 : i64} {
  func.func @_multi_lora_kernel(%arg0: i32, %arg1: i32, %arg2: i32, %arg3: memref<2xi32, #tpu.memory_space<smem>>, %arg4: memref<1x8x32xf32, #tpu.memory_space<vmem>>, %arg5: memref<32x32xf32, #tpu.memory_space<vmem>>, %arg6: memref<1x32xf32, #tpu.memory_space<vmem>>, %arg7: memref<1x32x8xf32, #tpu.memory_space<vmem>>, %arg8: memref<1x8x32xf32, #tpu.memory_space<vmem>>, %arg9: memref<1x8x32xf32, #tpu.memory_space<vmem>>, %arg10: memref<8x32xf32, #tpu.memory_space<vmem>>, %arg11: memref<8x8xf32, #tpu.memory_space<vmem>>) attributes {dimension_semantics = [#tpu.dimension_semantics<parallel>, #tpu.dimension_semantics<arbitrary>, #tpu.dimension_semantics<arbitrary>], iteration_bounds = array<i64: 2, 1, 1>, scalar_prefetch = 1 : i64, scratch_operands = 2 : i64, tpu.core_type = #tpu.core_type<tc>, window_params = [{transform_indices = @transform_0, window_bounds = array<i64: 1, 8, 32>}, {transform_indices = @transform_1, window_bounds = array<i64: 32, 32>}, {transform_indices = @transform_2, window_bounds = array<i64: 1, 32>}, {transform_indices = @transform_3, window_bounds = array<i64: 1, 32, 8>}, {transform_indices = @transform_4, window_bounds = array<i64: 1, 8, 32>}, {transform_indices = @transform_5, window_bounds = array<i64: 1, 8, 32>}]} {
    %c0 = arith.constant 0 : index
    %c0_0 = arith.constant 0 : index
    %c0_1 = arith.constant 0 : index
    %0 = vector.load %arg4[%c0, %c0_0, %c0_1] : memref<1x8x32xf32, #tpu.memory_space<vmem>>, vector<1x8x32xf32>
    %1 = vector.shape_cast %0 : vector<1x8x32xf32> to vector<8x32xf32>
    %c0_2 = arith.constant 0 : index
    %c0_3 = arith.constant 0 : index
    %2 = vector.load %arg5[%c0_2, %c0_3] : memref<32x32xf32, #tpu.memory_space<vmem>>, vector<32x32xf32>
    %cst = arith.constant dense<0.000000e+00> : vector<8x32xf32>
    %3 = tpu.matmul %1, %2, %cst {dimension_numbers = #tpu.dot_dimension_numbers<[1], [0], [0], [1], [0, 0, 1, 1], [], []>} : vector<8x32xf32>, vector<32x32xf32>, vector<8x32xf32> -> vector<8x32xf32>
    %c0_i32 = arith.constant 0 : i32
    %4 = arith.cmpi eq, %arg2, %c0_i32 : i32
    %5 = arith.extui %4 : i1 to i32
    %c0_i32_4 = arith.constant 0 : i32
    %6 = arith.cmpi ne, %5, %c0_i32_4 : i32
    scf.if %6 {
      %c0_11 = arith.constant 0 : index
      %c0_12 = arith.constant 0 : index
      %16 = vector.load %arg10[%c0_11, %c0_12] : memref<8x32xf32, #tpu.memory_space<vmem>>, vector<8x32xf32>
      tpu.vector_store %arg10[%c0_11, %c0_12], %3 {strides = array<i32>} : memref<8x32xf32, #tpu.memory_space<vmem>>, vector<8x32xf32>,
    } else {
    }
    %c0_i32_5 = arith.constant 0 : i32
    %7 = arith.cmpi sgt, %arg2, %c0_i32_5 : i32
    %8 = arith.extui %7 : i1 to i32
    %c0_i32_6 = arith.constant 0 : i32
    %9 = arith.cmpi ne, %8, %c0_i32_6 : i32
    scf.if %9 {
      %c0_11 = arith.constant 0 : index
      %c0_12 = arith.constant 0 : index
      %16 = vector.load %arg10[%c0_11, %c0_12] : memref<8x32xf32, #tpu.memory_space<vmem>>, vector<8x32xf32>
      %17 = arith.addf %16, %3 : vector<8x32xf32>
      %c0_13 = arith.constant 0 : index
      %c0_14 = arith.constant 0 : index
      %18 = vector.load %arg10[%c0_13, %c0_14] : memref<8x32xf32, #tpu.memory_space<vmem>>, vector<8x32xf32>
      tpu.vector_store %arg10[%c0_13, %c0_14], %17 {strides = array<i32>} : memref<8x32xf32, #tpu.memory_space<vmem>>, vector<8x32xf32>,
    } else {
    }
    %c0_i32_7 = arith.constant 0 : i32
    %10 = arith.cmpi eq, %arg1, %c0_i32_7 : i32
    %11 = arith.extui %10 : i1 to i32
    %c0_i32_8 = arith.constant 0 : i32
    %12 = arith.cmpi ne, %11, %c0_i32_8 : i32
    scf.if %12 {
      %c0_11 = arith.constant 0 : index
      %c0_12 = arith.constant 0 : index
      %c0_13 = arith.constant 0 : index
      %16 = vector.load %arg7[%c0_11, %c0_12, %c0_13] : memref<1x32x8xf32, #tpu.memory_space<vmem>>, vector<1x32x8xf32>
      %17 = vector.shape_cast %16 : vector<1x32x8xf32> to vector<32x8xf32>
      %cst_14 = arith.constant dense<0.000000e+00> : vector<8x8xf32>
      %18 = tpu.matmul %1, %17, %cst_14 {dimension_numbers = #tpu.dot_dimension_numbers<[1], [0], [0], [1], [0, 0, 1, 1], [], []>} : vector<8x32xf32>, vector<32x8xf32>, vector<8x8xf32> -> vector<8x8xf32>
      %c0_i32_15 = arith.constant 0 : i32
      %19 = arith.cmpi eq, %arg2, %c0_i32_15 : i32
      %20 = arith.extui %19 : i1 to i32
      %c0_i32_16 = arith.constant 0 : i32
      %21 = arith.cmpi ne, %20, %c0_i32_16 : i32
      scf.if %21 {
        %c0_19 = arith.constant 0 : index
        %c0_20 = arith.constant 0 : index
        %25 = vector.load %arg11[%c0_19, %c0_20] : memref<8x8xf32, #tpu.memory_space<vmem>>, vector<8x8xf32>
        tpu.vector_store %arg11[%c0_19, %c0_20], %18 {strides = array<i32>} : memref<8x8xf32, #tpu.memory_space<vmem>>, vector<8x8xf32>,
      } else {
      }
      %c0_i32_17 = arith.constant 0 : i32
      %22 = arith.cmpi sgt, %arg2, %c0_i32_17 : i32
      %23 = arith.extui %22 : i1 to i32
      %c0_i32_18 = arith.constant 0 : i32
      %24 = arith.cmpi ne, %23, %c0_i32_18 : i32
      scf.if %24 {
        %c0_19 = arith.constant 0 : index
        %c0_20 = arith.constant 0 : index
        %25 = vector.load %arg11[%c0_19, %c0_20] : memref<8x8xf32, #tpu.memory_space<vmem>>, vector<8x8xf32>
        %26 = arith.addf %25, %18 : vector<8x8xf32>
        %c0_21 = arith.constant 0 : index
        %c0_22 = arith.constant 0 : index
        %27 = vector.load %arg11[%c0_21, %c0_22] : memref<8x8xf32, #tpu.memory_space<vmem>>, vector<8x8xf32>
        tpu.vector_store %arg11[%c0_21, %c0_22], %26 {strides = array<i32>} : memref<8x8xf32, #tpu.memory_space<vmem>>, vector<8x8xf32>,
      } else {
      }
    } else {
    }
    %c0_i32_9 = arith.constant 0 : i32
    %13 = arith.cmpi eq, %arg2, %c0_i32_9 : i32
    %14 = arith.extui %13 : i1 to i32
    %c0_i32_10 = arith.constant 0 : i32
    %15 = arith.cmpi ne, %14, %c0_i32_10 : i32
    scf.if %15 {
      %c0_11 = arith.constant 0 : index
      %c0_12 = arith.constant 0 : index
      %16 = vector.load %arg11[%c0_11, %c0_12] : memref<8x8xf32, #tpu.memory_space<vmem>>, vector<8x8xf32>
      %c0_13 = arith.constant 0 : index
      %c0_14 = arith.constant 0 : index
      %c0_15 = arith.constant 0 : index
      %17 = vector.load %arg8[%c0_13, %c0_14, %c0_15] : memref<1x8x32xf32, #tpu.memory_space<vmem>>, vector<1x8x32xf32>
      %18 = vector.shape_cast %17 : vector<1x8x32xf32> to vector<8x32xf32>
      %cst_16 = arith.constant dense<0.000000e+00> : vector<8x32xf32>
      %19 = tpu.matmul %16, %18, %cst_16 {dimension_numbers = #tpu.dot_dimension_numbers<[1], [0], [0], [1], [0, 0, 1, 1], [], []>} : vector<8x8xf32>, vector<8x32xf32>, vector<8x32xf32> -> vector<8x32xf32>
      %c0_17 = arith.constant 0 : index
      %c0_18 = arith.constant 0 : index
      %20 = vector.load %arg10[%c0_17, %c0_18] : memref<8x32xf32, #tpu.memory_space<vmem>>, vector<8x32xf32>
      %c0_19 = arith.constant 0 : index
      %c0_20 = arith.constant 0 : index
      %21 = vector.load %arg6[%c0_19, %c0_20] : memref<1x32xf32, #tpu.memory_space<vmem>>, vector<1x32xf32>
      %22 = vector.broadcast %21 : vector<1x32xf32> to vector<8x32xf32>
      %23 = arith.addf %20, %22 : vector<8x32xf32>
      %24 = arith.addf %23, %19 : vector<8x32xf32>
      %c0_21 = arith.constant 0 : index
      %c0_22 = arith.constant 0 : index
      %c0_23 = arith.constant 0 : index
      %25 = vector.load %arg9[%c0_21, %c0_22, %c0_23] : memref<1x8x32xf32, #tpu.memory_space<vmem>>, vector<1x8x32xf32>
      %26 = vector.shape_cast %25 : vector<1x8x32xf32> to vector<8x32xf32>
      %27 = vector.shape_cast %24 : vector<8x32xf32> to vector<1x8x32xf32>
      tpu.vector_store %arg9[%c0_21, %c0_22, %c0_23], %27 {strides = array<i32>} : memref<1x8x32xf32, #tpu.memory_space<vmem>>, vector<1x8x32xf32>,
    } else {
    }
    return
  }
  func.func @transform_0(%arg0: i32, %arg1: i32, %arg2: i32, %arg3: memref<2xi32, #tpu.memory_space<smem>>) -> (i32, i32, i32) {
    %c0_i32 = arith.constant 0 : i32
    %c0_i32_0 = arith.constant 0 : i32
    return %arg0, %c0_i32, %arg2 : i32, i32, i32
  }
  func.func @transform_1(%arg0: i32, %arg1: i32, %arg2: i32, %arg3: memref<2xi32, #tpu.memory_space<smem>>) -> (i32, i32) {
    %c0_i32 = arith.constant 0 : i32
    return %arg2, %arg1 : i32, i32
  }
  func.func @transform_2(%arg0: i32, %arg1: i32, %arg2: i32, %arg3: memref<2xi32, #tpu.memory_space<smem>>) -> (i32, i32) {
    %c0_i32 = arith.constant 0 : i32
    %c0_i32_0 = arith.constant 0 : i32
    return %c0_i32, %arg1 : i32, i32
  }
  func.func @transform_3(%arg0: i32, %arg1: i32, %arg2: i32, %arg3: memref<2xi32, #tpu.memory_space<smem>>) -> (i32, i32, i32) {
    %0 = arith.index_cast %arg0 : i32 to index
    %1 = memref.load %arg3[%0] : memref<2xi32, #tpu.memory_space<smem>>
    %c0_i32 = arith.constant 0 : i32
    %2 = arith.cmpi eq, %arg1, %c0_i32 : i32
    %c0_i32_0 = arith.constant 0 : i32
    %3 = arith.select %2, %arg2, %c0_i32_0 : i32
    %c0_i32_1 = arith.constant 0 : i32
    %c0_i32_2 = arith.constant 0 : i32
    return %1, %3, %c0_i32_1 : i32, i32, i32
  }
  func.func @transform_4(%arg0: i32, %arg1: i32, %arg2: i32, %arg3: memref<2xi32, #tpu.memory_space<smem>>) -> (i32, i32, i32) {
    %0 = arith.index_cast %arg0 : i32 to index
    %1 = memref.load %arg3[%0] : memref<2xi32, #tpu.memory_space<smem>>
    %c0_i32 = arith.constant 0 : i32
    %c0_i32_0 = arith.constant 0 : i32
    return %1, %c0_i32, %arg1 : i32, i32, i32
  }
  func.func @transform_5(%arg0: i32, %arg1: i32, %arg2: i32, %arg3: memref<2xi32, #tpu.memory_space<smem>>) -> (i32, i32, i32) {
    %c0_i32 = arith.constant 0 : i32
    %c0_i32_0 = arith.constant 0 : i32
    return %arg0, %c0_i32, %arg1 : i32, i32, i32
  }
}

</mosaic_0001>

<llo_original>
// kernel: multi_lora_forward.1
$region0: #{multi_lora_forward.1}
  #allocation0 [shape = 'u32[]', space=smem, size = 0x4, offset = 0x4, fixed_abs, tag = 'smem constant byte address 0x4 - core index']
  #allocation1 [shape = 'u32[72,128]{1,0:T(1,128)}', space=vmem, size = 0x9000, scoped, tag = 'internal scratch']
  #allocation2 [shape = 'f32[8,32]{1,0:T(8,128)}', space=vmem, size = 0x1000, scoped, tag = 'scratch operand']
  #allocation3 [shape = 'f32[8,8]{1,0:T(8,128)}', space=vmem, size = 0x1000, scoped, tag = 'scratch operand']
  #allocation4 [shape = 's32[1]{0}', space=sflag, size = 0x4, scoped, tag = 'scoped memory for multi_lora_forward.1']
  #allocation5 [shape = 'u8[512]{0}', space=smem, size = 0x200, scoped, tag = 'prefetched SMEM operand 0']
  %s0 = inlined_call_operand.vmem [shape: s32[2], index: 0, kind: input, shape index: {}]
  %s1 = inlined_call_operand.vmem [shape: f32[2,8,32], index: 1, kind: input, shape index: {}]
  %s2 = inlined_call_operand.vmem [shape: f32[32,32], index: 2, kind: input, shape index: {}]
  %s3 = inlined_call_operand.vmem [shape: f32[1,32], index: 3, kind: input, shape index: {}]
  %s4 = inlined_call_operand.vmem [shape: f32[3,32,8], index: 4, kind: input, shape index: {}]
  %s5 = inlined_call_operand.vmem [shape: f32[3,8,32], index: 5, kind: input, shape index: {}]
  %s6 = inlined_call_operand.hbm [shape: f32[2,8,32], index: 6, kind: output, shape index: {}]
  %s7 = sld [smem:[#allocation0]]
  $region77: #{multi_lora_forward.1} parent=0
    _
  %s9 = ssub.s32 1, %s7
  %s10 = scalar_select 0, %s9, %s7
  %s12 = sshll.u32 %s0, 4
  %s13 = int_to_ptr.vmem [resolvable:$true] %s12
  %15 = dma.vmem_to_smem %s13, 16, [#allocation5], [#allocation4]
  %17 = dma.done [#allocation4], 16
  %18 = sfence
  $region1: #{multi_lora_forward.1} parent=0
    #allocation6 [shape = 'u8[8192]{0}', space=vmem, size = 0x2000, scoped, tag = 'output window, operand 0']
    #allocation7 [shape = 's32[2]{0}', space=sflag, size = 0x8, scoped, tag = 'scoped memory for multi_lora_forward.1']
    %19 = vsyncpa [#allocation7], 0
    %s20 = scalar_lea.sflag [#allocation7], 1
    %21 = vsyncpa %s20, 0
    loop: start=0, step=1, limit=4
    $region2: #{multi_lora_forward.1} parent=1 // loop_pre_header
      _
    $region3: #{multi_lora_forward.1} parent=1 // loop_header
      %s23 = sphi 0, %s27
      %p24 = scmp.ge.s32.totalorder %s23, 4
      %s30 = sphi 0, %s49
      %s31 = sphi 0, %s45
      %s32 = sphi 0, %s41
      %s33 = sphi 0, %s30
      %s34 = sphi 0, %s31
      %s35 = sphi 0, %s32
      %s36 = sphi 0, %s33
      %s37 = sphi 0, %s34
      %s38 = sphi 0, %s35
      %s54 = sphi 0, %s56
      %s57 = sphi 0, %s54
      %s58 = sphi 0, %s57
      %s74 = sphi 0, %s58
      %s82 = sphi 0, %s84
      %s85 = sphi 0, %s82
      %s86 = sphi 0, %s85
      %s102 = sphi 0, %s86
      %s108 = sphi 0, %s110
      %s111 = sphi 0, %s108
      %s112 = sphi 0, %s111
      %s128 = sphi 0, %s112
      %s142 = sphi 0, %s144
      %s145 = sphi 0, %s142
      %s146 = sphi 0, %s145
      %s162 = sphi 0, %s146
      %s172 = sphi 0, %s174
      %s175 = sphi 0, %s172
      %s176 = sphi 0, %s175
      %s192 = sphi 0, %s176
      %s200 = sphi 0, %s202
      %s203 = sphi 0, %s200
      %s204 = sphi 0, %s203
      %s220 = sphi 0, %s204
    $region4: #{multi_lora_forward.1} parent=1 // loop_header_branch
      %26 = sbr.rel (%p24) target = $region8
    $region5: #{multi_lora_forward.1} parent=1 // loop_body
      %s28 = ssub.s32 %s23, 1
      %s29 = ssub.s32 %s23, 2
      %s39 = sadd.s32 1, %s32
      %p40 = scmp.ge.s32.totalorder %s39, 1
      %s41 = scalar_select %p40, 0, %s39
      %s42 = sadd.s32 1, %s31
      %s43 = scalar_select %p40, %s42, %s31
      %p44 = scmp.ge.s32.totalorder %s43, 1
      %s45 = scalar_select %p44, 0, %s43
      %s46 = sadd.s32 1, %s30
      %s47 = scalar_select %p44, %s46, %s30
      %p48 = scmp.ge.s32.totalorder %s47, 2
      %s49 = scalar_select %p48, 0, %s47
      %s50 = ssub.s32 %s30, %s49
      %s51 = ssub.s32 %s32, %s41
      %s52 = sor.u32 %s50, %s51
      %p53 = scmp.eq.s32.totalorder %s52, 0
      %s55 = sadd.s32 %s54, 1
      %s56 = scalar_select %p53, %s54, %s55
      %p59 = pneg %p53
      %p60 = scmp.eq.s32.totalorder %s23, 1
      %p61 = por %p59, %p60
      %p62 = scmp.ne.s32.totalorder %s54, %s57
      %p63 = scmp.eq.s32.totalorder %s23, 0
      %p64 = por %p62, %p63
      %p65 = scmp.ne.s32.totalorder %s54, %s57
      %p66 = scmp.eq.s32.totalorder %s28, 1
      %p67 = por %p65, %p66
      %p68 = scmp.ne.s32.totalorder %s57, %s58
      %p69 = scmp.eq.s32.totalorder %s28, 0
      %p70 = por %p68, %p69
      %p71 = scmp.ne.s32.totalorder %s57, %s58
      %p72 = scmp.eq.s32.totalorder %s29, 1
      %p73 = por %p71, %p72
      %p75 = scmp.ne.s32.totalorder %s58, %s74
      %p76 = scmp.eq.s32.totalorder %s29, 0
      %p77 = por %p75, %p76
      %s78 = ssub.s32 %s32, %s41
      %s79 = ssub.s32 %s31, %s45
      %s80 = sor.u32 %s78, %s79
      %p81 = scmp.eq.s32.totalorder %s80, 0
      %s83 = sadd.s32 %s82, 1
      %s84 = scalar_select %p81, %s82, %s83
      %p87 = pneg %p81
      %p88 = scmp.eq.s32.totalorder %s23, 1
      %p89 = por %p87, %p88
      %p90 = scmp.ne.s32.totalorder %s82, %s85
      %p91 = scmp.eq.s32.totalorder %s23, 0
      %p92 = por %p90, %p91
      %p93 = scmp.ne.s32.totalorder %s82, %s85
      %p94 = scmp.eq.s32.totalorder %s28, 1
      %p95 = por %p93, %p94
      %p96 = scmp.ne.s32.totalorder %s85, %s86
      %p97 = scmp.eq.s32.totalorder %s28, 0
      %p98 = por %p96, %p97
      %p99 = scmp.ne.s32.totalorder %s85, %s86
      %p100 = scmp.eq.s32.totalorder %s29, 1
      %p101 = por %p99, %p100
      %p103 = scmp.ne.s32.totalorder %s86, %s102
      %p104 = scmp.eq.s32.totalorder %s29, 0
      %p105 = por %p103, %p104
      %s106 = ssub.s32 %s31, %s45
      %p107 = scmp.eq.s32.totalorder %s106, 0
      %s109 = sadd.s32 %s108, 1
      %s110 = scalar_select %p107, %s108, %s109
      %p113 = pneg %p107
      %p114 = scmp.eq.s32.totalorder %s23, 1
      %p115 = por %p113, %p114
      %p116 = scmp.ne.s32.totalorder %s108, %s111
      %p117 = scmp.eq.s32.totalorder %s23, 0
      %p118 = por %p116, %p117
      %p119 = scmp.ne.s32.totalorder %s108, %s111
      %p120 = scmp.eq.s32.totalorder %s28, 1
      %p121 = por %p119, %p120
      %p122 = scmp.ne.s32.totalorder %s111, %s112
      %p123 = scmp.eq.s32.totalorder %s28, 0
      %p124 = por %p122, %p123
      %p125 = scmp.ne.s32.totalorder %s111, %s112
      %p126 = scmp.eq.s32.totalorder %s29, 1
      %p127 = por %p125, %p126
      %p129 = scmp.ne.s32.totalorder %s112, %s128
      %p130 = scmp.eq.s32.totalorder %s29, 0
      %p131 = por %p129, %p130
      %s132 = sld [smem:[#allocation5 + %s30]]
      %p133 = scmp.eq.s32.totalorder %s31, 0
      %s134 = scalar_select %p133, %s32, 0
      %s135 = sld [smem:[#allocation5 + %s49]]
      %p136 = scmp.eq.s32.totalorder %s45, 0
      %s137 = scalar_select %p136, %s41, 0
      %s138 = ssub.s32 %s132, %s135
      %s139 = ssub.s32 %s134, %s137
      %s140 = sor.u32 %s138, %s139
      %p141 = scmp.eq.s32.totalorder %s140, 0
      %s143 = sadd.s32 %s142, 1
      %s144 = scalar_select %p141, %s142, %s143
      %p147 = pneg %p141
      %p148 = scmp.eq.s32.totalorder %s23, 1
      %p149 = por %p147, %p148
      %p150 = scmp.ne.s32.totalorder %s142, %s145
      %p151 = scmp.eq.s32.totalorder %s23, 0
      %p152 = por %p150, %p151
      %p153 = scmp.ne.s32.totalorder %s142, %s145
      %p154 = scmp.eq.s32.totalorder %s28, 1
      %p155 = por %p153, %p154
      %p156 = scmp.ne.s32.totalorder %s145, %s146
      %p157 = scmp.eq.s32.totalorder %s28, 0
      %p158 = por %p156, %p157
      %p159 = scmp.ne.s32.totalorder %s145, %s146
      %p160 = scmp.eq.s32.totalorder %s29, 1
      %p161 = por %p159, %p160
      %p163 = scmp.ne.s32.totalorder %s146, %s162
      %p164 = scmp.eq.s32.totalorder %s29, 0
      %p165 = por %p163, %p164
      %s166 = sld [smem:[#allocation5 + %s30]]
      %s167 = sld [smem:[#allocation5 + %s49]]
      %s168 = ssub.s32 %s166, %s167
      %s169 = ssub.s32 %s31, %s45
      %s170 = sor.u32 %s168, %s169
      %p171 = scmp.eq.s32.totalorder %s170, 0
      %s173 = sadd.s32 %s172, 1
      %s174 = scalar_select %p171, %s172, %s173
      %p177 = pneg %p171
      %p178 = scmp.eq.s32.totalorder %s23, 1
      %p179 = por %p177, %p178
      %p180 = scmp.ne.s32.totalorder %s172, %s175
      %p181 = scmp.eq.s32.totalorder %s23, 0
      %p182 = por %p180, %p181
      %p183 = scmp.ne.s32.totalorder %s172, %s175
      %p184 = scmp.eq.s32.totalorder %s28, 1
      %p185 = por %p183, %p184
      %p186 = scmp.ne.s32.totalorder %s175, %s176
      %p187 = scmp.eq.s32.totalorder %s28, 0
      %p188 = por %p186, %p187
      %p189 = scmp.ne.s32.totalorder %s175, %s176
      %p190 = scmp.eq.s32.totalorder %s29, 1
      %p191 = por %p189, %p190
      %p193 = scmp.ne.s32.totalorder %s176, %s192
      %p194 = scmp.eq.s32.totalorder %s29, 0
      %p195 = por %p193, %p194
      %s196 = ssub.s32 %s30, %s49
      %s197 = ssub.s32 %s31, %s45
      %s198 = sor.u32 %s196, %s197
      %p199 = scmp.eq.s32.totalorder %s198, 0
      %s201 = sadd.s32 %s200, 1
      %s202 = scalar_select %p199, %s200, %s201
      %p205 = pneg %p199
      %p206 = scmp.eq.s32.totalorder %s23, 1
      %p207 = por %p205, %p206
      %p208 = scmp.ne.s32.totalorder %s200, %s203
      %p209 = scmp.eq.s32.totalorder %s23, 0
      %p210 = por %p208, %p209
      %p211 = scmp.ne.s32.totalorder %s200, %s203
      %p212 = scmp.eq.s32.totalorder %s28, 1
      %p213 = por %p211, %p212
      %p214 = scmp.ne.s32.totalorder %s203, %s204
      %p215 = scmp.eq.s32.totalorder %s28, 0
      %p216 = por %p214, %p215
      %p217 = scmp.ne.s32.totalorder %s203, %s204
      %p218 = scmp.eq.s32.totalorder %s29, 1
      %p219 = por %p217, %p218
      %p221 = scmp.ne.s32.totalorder %s204, %s220
      %p222 = scmp.eq.s32.totalorder %s29, 0
      %p223 = por %p221, %p222
      %p224 = scmp.le.s32.totalorder 1, %s23
      %p225 = scmp.lt.s32.totalorder %s23, 3
      %p226 = pnand %p224, %p225
      %p227 = pneg %p226
      // Predicated region
      $region9: #{multi_lora_forward.1} parent=5 // pred_check
        _
      $region10: #{multi_lora_forward.1} parent=5 // pred_check_branch
        %229 = sbr.rel (%p226) target = $region12
      $region11: #{multi_lora_forward.1} parent=5 // pred_region
        %s230 = ssub.s32 %s23, 1
        // Predicated region
        $region13: #{multi_lora_forward.1} parent=11 // pred_check
          %p231 = pneg %p98
        $region14: #{multi_lora_forward.1} parent=11 // pred_check_branch
          %233 = sbr.rel (%p231) target = $region16
        $region15: #{multi_lora_forward.1} parent=11 // pred_region
          %s234 = smul.u32 4, %s35
          %p235 = scmp.lt.s32.totalorder %s234, 3
          %s236 = scalar_select %p235, %s234, 3
          %p237 = scmp.lt.s32.totalorder %s34, 0
          %s238 = scalar_select %p237, %s34, 0
          %s239 = sadd.s32 %s238, %s236
          %s240 = smul.addr %s239, 8
          %s241 = scalar_lea.vmem %s2, %s240
          %s242 = smul.u32 4, %s35
        $region16: #{multi_lora_forward.1} parent=11 // pred_fallthru
          _
        // Predicated region
        $region17: #{multi_lora_forward.1} parent=11 // pred_check
          %p243 = pneg %p124
        $region18: #{multi_lora_forward.1} parent=11 // pred_check_branch
          %245 = sbr.rel (%p243) target = $region20
        $region19: #{multi_lora_forward.1} parent=11 // pred_region
          %p246 = scmp.lt.s32.totalorder %s34, 0
          %s247 = scalar_select %p246, %s34, 0
          %s248 = scalar_lea.vmem %s3, %s247
        $region20: #{multi_lora_forward.1} parent=11 // pred_fallthru
          _
      $region12: #{multi_lora_forward.1} parent=5 // pred_fallthru
        _
      %p249 = scmp.lt.s32.totalorder %s23, 2
      // Predicated region
      $region21: #{multi_lora_forward.1} parent=5 // pred_check
        %p250 = pneg %p249
      $region22: #{multi_lora_forward.1} parent=5 // pred_check_branch
        %252 = sbr.rel (%p250) target = $region24
      $region23: #{multi_lora_forward.1} parent=5 // pred_region
        // Predicated region
        $region25: #{multi_lora_forward.1} parent=23 // pred_check
          %p253 = pneg %p64
        $region26: #{multi_lora_forward.1} parent=23 // pred_check_branch
          %255 = sbr.rel (%p253) target = $region28
        $region27: #{multi_lora_forward.1} parent=23 // pred_region
          %p256 = scmp.lt.s32.totalorder %s30, 1
          %s257 = scalar_select %p256, %s30, 1
          %p258 = scmp.lt.s32.totalorder %s32, 0
          %s259 = scalar_select %p258, %s32, 0
          %s260 = sadd.s32 %s259, %s257
          %s261 = smul.addr %s260, 8
          %s262 = scalar_lea.vmem %s1, %s261
        $region28: #{multi_lora_forward.1} parent=23 // pred_fallthru
          _
        // Predicated region
        $region29: #{multi_lora_forward.1} parent=23 // pred_check
          %p263 = pneg %p152
        $region30: #{multi_lora_forward.1} parent=23 // pred_check_branch
          %265 = sbr.rel (%p263) target = $region32
        $region31: #{multi_lora_forward.1} parent=23 // pred_region
          %s266 = sld [smem:[#allocation5 + %s30]]
          %p267 = scmp.eq.s32.totalorder %s31, 0
          %s268 = scalar_select %p267, %s32, 0
          %s269 = smul.u32 4, %s268
          %p270 = scmp.lt.s32.totalorder %s266, 2
          %s271 = scalar_select %p270, %s266, 2
          %p272 = scmp.lt.s32.totalorder %s269, 3
          %s273 = scalar_select %p272, %s269, 3
          %s274 = smul.addr %s271, 4
          %s275 = sadd.s32 %s273, %s274
          %s276 = smul.addr %s275, 8
          %s277 = scalar_lea.vmem %s4, %s276
          %s278 = sld [smem:[#allocation5 + %s30]]
          %p279 = scmp.eq.s32.totalorder %s31, 0
          %s280 = scalar_select %p279, %s32, 0
          %s281 = smul.u32 4, %s280
        $region32: #{multi_lora_forward.1} parent=23 // pred_fallthru
          _
        // Predicated region
        $region33: #{multi_lora_forward.1} parent=23 // pred_check
          %p282 = pneg %p182
        $region34: #{multi_lora_forward.1} parent=23 // pred_check_branch
          %284 = sbr.rel (%p282) target = $region36
        $region35: #{multi_lora_forward.1} parent=23 // pred_region
          %s285 = sld [smem:[#allocation5 + %s30]]
          %p286 = scmp.lt.s32.totalorder %s285, 2
          %s287 = scalar_select %p286, %s285, 2
          %p288 = scmp.lt.s32.totalorder %s31, 0
          %s289 = scalar_select %p288, %s31, 0
          %s290 = sadd.s32 %s289, %s287
          %s291 = smul.addr %s290, 8
          %s292 = scalar_lea.vmem %s5, %s291
          %s293 = sld [smem:[#allocation5 + %s30]]
        $region36: #{multi_lora_forward.1} parent=23 // pred_fallthru
          _
      $region24: #{multi_lora_forward.1} parent=5 // pred_fallthru
        _
      %p294 = scmp.le.s32.totalorder 1, %s23
      %p295 = scmp.lt.s32.totalorder %s23, 3
      %p296 = pnand %p294, %p295
      %p297 = pneg %p296
      // Predicated region
      $region37: #{multi_lora_forward.1} parent=5 // pred_check
        _
      $region38: #{multi_lora_forward.1} parent=5 // pred_check_branch
        %299 = sbr.rel (%p296) target = $region40
      $region39: #{multi_lora_forward.1} parent=5 // pred_region
        %s300 = ssub.s32 %s23, 1
        %p301 = scmp.lt.s32.totalorder %s33, 1
        %s302 = scalar_select %p301, %s33, 1
        %p303 = scmp.lt.s32.totalorder %s35, 0
        %s304 = scalar_select %p303, %s35, 0
        %s305 = sadd.s32 %s304, %s302
        %s306 = smul.addr %s305, 8
        %s307 = scalar_lea.vmem %s1, %s306
        %p308 = pneg %p70
        %p309 = pneg %p67
        %s310 = smul.u32 4, %s35
        %p311 = scmp.lt.s32.totalorder %s310, 3
        %s312 = scalar_select %p311, %s310, 3
        %p313 = scmp.lt.s32.totalorder %s34, 0
        %s314 = scalar_select %p313, %s34, 0
        %s315 = sadd.s32 %s314, %s312
        %s316 = smul.addr %s315, 8
        %s317 = scalar_lea.vmem %s2, %s316
        %p318 = pneg %p98
        %p319 = pneg %p95
        %p320 = scmp.lt.s32.totalorder %s34, 0
        %s321 = scalar_select %p320, %s34, 0
        %s322 = scalar_lea.vmem %s3, %s321
        %p323 = pneg %p124
        %p324 = pneg %p121
        %s325 = sld [smem:[#allocation5 + %s33]]
        %p326 = scmp.eq.s32.totalorder %s34, 0
        %s327 = scalar_select %p326, %s35, 0
        %s328 = smul.u32 4, %s327
        %p329 = scmp.lt.s32.totalorder %s325, 2
        %s330 = scalar_select %p329, %s325, 2
        %p331 = scmp.lt.s32.totalorder %s328, 3
        %s332 = scalar_select %p331, %s328, 3
        %s333 = smul.addr %s330, 4
        %s334 = sadd.s32 %s332, %s333
        %s335 = smul.addr %s334, 8
        %s336 = scalar_lea.vmem %s4, %s335
        %p337 = pneg %p158
        %p338 = pneg %p155
        %s339 = sld [smem:[#allocation5 + %s33]]
        %p340 = scmp.lt.s32.totalorder %s339, 2
        %s341 = scalar_select %p340, %s339, 2
        %p342 = scmp.lt.s32.totalorder %s34, 0
        %s343 = scalar_select %p342, %s34, 0
        %s344 = sadd.s32 %s343, %s341
        %s345 = smul.addr %s344, 8
        %s346 = scalar_lea.vmem %s5, %s345
        %p347 = pneg %p188
        %p348 = pneg %p185
        %p349 = pneg %p216
        %p350 = pneg %p213
        %s351 = sand.u32 %s203, 1
        %s352 = scalar_lea.sflag [#allocation7], %s351
        %s353 = sand.u32 %s203, 1
        %s354 = smul.addr %s353, 8
        %s355 = scalar_lea.vmem [#allocation6], %s354
        %p356 = scmp.lt.s32.totalorder %s33, 1
        %s357 = scalar_select %p356, %s33, 1
        %p358 = scmp.lt.s32.totalorder %s35, 0
        %s359 = scalar_select %p358, %s35, 0
        %s360 = sadd.s32 %s359, %s357
        %s361 = smul.addr %s360, 8
        %s362 = scalar_lea.vmem %s1, %s361
        %s363 = smul.u32 4, %s35
        %p364 = scmp.lt.s32.totalorder %s363, 3
        %s365 = scalar_select %p364, %s363, 3
        %p366 = scmp.lt.s32.totalorder %s34, 0
        %s367 = scalar_select %p366, %s34, 0
        %s368 = sadd.s32 %s367, %s365
        %s369 = smul.addr %s368, 8
        %s370 = scalar_lea.vmem %s2, %s369
        %s371 = smul.u32 4, %s35
        %p372 = scmp.lt.s32.totalorder %s34, 0
        %s373 = scalar_select %p372, %s34, 0
        %s374 = scalar_lea.vmem %s3, %s373
        %s375 = sld [smem:[#allocation5 + %s33]]
        %p376 = scmp.eq.s32.totalorder %s34, 0
        %s377 = scalar_select %p376, %s35, 0
        %s378 = smul.u32 4, %s377
        %p379 = scmp.lt.s32.totalorder %s375, 2
        %s380 = scalar_select %p379, %s375, 2
        %p381 = scmp.lt.s32.totalorder %s378, 3
        %s382 = scalar_select %p381, %s378, 3
        %s383 = smul.addr %s380, 4
        %s384 = sadd.s32 %s382, %s383
        %s385 = smul.addr %s384, 8
        %s386 = scalar_lea.vmem %s4, %s385
        %s387 = sld [smem:[#allocation5 + %s33]]
        %p388 = scmp.eq.s32.totalorder %s34, 0
        %s389 = scalar_select %p388, %s35, 0
        %s390 = smul.u32 4, %s389
        %s391 = sld [smem:[#allocation5 + %s33]]
        %p392 = scmp.lt.s32.totalorder %s391, 2
        %s393 = scalar_select %p392, %s391, 2
        %p394 = scmp.lt.s32.totalorder %s34, 0
        %s395 = scalar_select %p394, %s34, 0
        %s396 = sadd.s32 %s395, %s393
        %s397 = smul.addr %s396, 8
        %s398 = scalar_lea.vmem %s5, %s397
        %s399 = sld [smem:[#allocation5 + %s33]]
        %v400 = vld [vmem:[%s362] sm:$0xff]
        %v401 = vld [vmem:[%s370] sm:$0xff]
        %v402 = vld [vmem:[%s370 + $0x8] sm:$0xff]
        %v403 = vld [vmem:[%s370 + $0x10] sm:$0xff]
        %v404 = vld [vmem:[%s370 + $0x18] sm:$0xff]
        %vm405 = vcmask 261120
        %v407 = vsel %vm405, %v400, 0
        %409 = vmatpush.msra.mxu0 0.0
        %410 = vmatpush.msra.mxu0 0.0
        %411 = vmatpush.msra.mxu0 0.0
        %412 = vmatpush.msra.mxu0 0.0
        %413 = vmatpush.msra.mxu0 0.0
        %414 = vmatpush.msra.mxu0 0.0
        %415 = vmatpush.msra.mxu0 0.0
        %416 = vmatpush.msra.mxu0 0.0
        %417 = vmatpush.msra.mxu0 0.0
        %418 = vmatpush.msra.mxu0 0.0
        %419 = vmatpush.msra.mxu0 0.0
        %420 = vmatpush.msra.mxu0 0.0
        %421 = vmatpush.msra.mxu0 %v404
        %422 = vmatpush.msra.mxu0 %v403
        %423 = vmatpush.msra.mxu0 %v402
        %424 = vmatpush.msra.mxu0 %v401
        %425 = vmatmul.f32.gmra.mxu0 %v407
        %v426 = vpop.f32.mrf.mxu0
        %v427 = vadd.f32 0.0, %v426
        %428 = vdwg.mxu0
        %p429 = scmp.eq.s32.totalorder %s35, 0
        // Predicated region
        $region41: #{multi_lora_forward.1} parent=39 // pred_check
          %p430 = pneg %p429
        $region42: #{multi_lora_forward.1} parent=39 // pred_check_branch
          %432 = sbr.rel (%p430) target = $region44
        $region43: #{multi_lora_forward.1} parent=39 // pred_region
          %433 = vst.msk [vmem:[#allocation2] sm:$0xff] %vm405, %v427
        $region44: #{multi_lora_forward.1} parent=39 // pred_fallthru
          _
        %p434 = scmp.gt.s32.totalorder %s35, 0
        // Predicated region
        $region45: #{multi_lora_forward.1} parent=39 // pred_check
          %p435 = pneg %p434
        $region46: #{multi_lora_forward.1} parent=39 // pred_check_branch
          %437 = sbr.rel (%p435) target = $region48
        $region47: #{multi_lora_forward.1} parent=39 // pred_region
          %v438 = vld [vmem:[#allocation2] sm:$0xff]
          %v439 = vadd.f32 %v438, %v427
          %440 = vst.msk [vmem:[#allocation2] sm:$0xff] %vm405, %v439
        $region48: #{multi_lora_forward.1} parent=39 // pred_fallthru
          _
        %p441 = scmp.eq.s32.totalorder %s34, 0
        // Predicated region
        $region49: #{multi_lora_forward.1} parent=39 // pred_check
          %p442 = pneg %p441
        $region50: #{multi_lora_forward.1} parent=39 // pred_check_branch
          %444 = sbr.rel (%p442) target = $region52
        $region51: #{multi_lora_forward.1} parent=39 // pred_region
          %v445 = vld [vmem:[%s386] sm:$0xff]
          %v446 = vld [vmem:[%s386 + $0x8] sm:$0xff]
          %v447 = vld [vmem:[%s386 + $0x10] sm:$0xff]
          %v448 = vld [vmem:[%s386 + $0x18] sm:$0xff]
          %449 = vmatpush.msra.mxu0 0.0
          %450 = vmatpush.msra.mxu0 0.0
          %451 = vmatpush.msra.mxu0 0.0
          %452 = vmatpush.msra.mxu0 0.0
          %453 = vmatpush.msra.mxu0 0.0
          %454 = vmatpush.msra.mxu0 0.0
          %455 = vmatpush.msra.mxu0 0.0
          %456 = vmatpush.msra.mxu0 0.0
          %457 = vmatpush.msra.mxu0 0.0
          %458 = vmatpush.msra.mxu0 0.0
          %459 = vmatpush.msra.mxu0 0.0
          %460 = vmatpush.msra.mxu0 0.0
          %461 = vmatpush.msra.mxu0 %v448
          %462 = vmatpush.msra.mxu0 %v447
          %463 = vmatpush.msra.mxu0 %v446
          %464 = vmatpush.msra.mxu0 %v445
          %465 = vmatmul.f32.gmra.mxu0 %v407
          %v466 = vpop.f32.mrf.mxu0
          %v467 = vadd.f32 0.0, %v466
          %468 = vdwg.mxu0
          // Predicated region
          $region53: #{multi_lora_forward.1} parent=51 // pred_check
            %p469 = pneg %p429
          $region54: #{multi_lora_forward.1} parent=51 // pred_check_branch
            %471 = sbr.rel (%p469) target = $region56
          $region55: #{multi_lora_forward.1} parent=51 // pred_region
            %vm472 = vcmask 64512
            %473 = vst.msk [vmem:[#allocation3] sm:$0xff] %vm472, %v467
          $region56: #{multi_lora_forward.1} parent=51 // pred_fallthru
            _
          // Predicated region
          $region57: #{multi_lora_forward.1} parent=51 // pred_check
            %p474 = pneg %p434
          $region58: #{multi_lora_forward.1} parent=51 // pred_check_branch
            %476 = sbr.rel (%p474) target = $region60
          $region59: #{multi_lora_forward.1} parent=51 // pred_region
            %v477 = vld [vmem:[#allocation3] sm:$0xff]
            %v478 = vadd.f32 %v477, %v467
            %vm479 = vcmask 64512
            %480 = vst.msk [vmem:[#allocation3] sm:$0xff] %vm479, %v478
          $region60: #{multi_lora_forward.1} parent=51 // pred_fallthru
            _
        $region52: #{multi_lora_forward.1} parent=39 // pred_fallthru
          _
        // Predicated region
        $region61: #{multi_lora_forward.1} parent=39 // pred_check
          %p481 = pneg %p429
        $region62: #{multi_lora_forward.1} parent=39 // pred_check_branch
          %483 = sbr.rel (%p481) target = $region64
        $region63: #{multi_lora_forward.1} parent=39 // pred_region
          %v484 = vld [vmem:[#allocation3] sm:$0xff]
          %v485 = vld [vmem:[%s398] sm:$0xff]
          %vm486 = vcmask 64512
          %v488 = vsel %vm486, %v484, 0
          %490 = vmatpush.msra.mxu0 0.0
          %491 = vmatpush.msra.mxu0 0.0
          %492 = vmatpush.msra.mxu0 0.0
          %493 = vmatpush.msra.mxu0 0.0
          %494 = vmatpush.msra.mxu0 0.0
          %495 = vmatpush.msra.mxu0 0.0
          %496 = vmatpush.msra.mxu0 0.0
          %497 = vmatpush.msra.mxu0 0.0
          %498 = vmatpush.msra.mxu0 0.0
          %499 = vmatpush.msra.mxu0 0.0
          %500 = vmatpush.msra.mxu0 0.0
          %501 = vmatpush.msra.mxu0 0.0
          %502 = vmatpush.msra.mxu0 0.0
          %503 = vmatpush.msra.mxu0 0.0
          %504 = vmatpush.msra.mxu0 0.0
          %505 = vmatpush.msra.mxu0 %v485
          %506 = vmatmul.f32.gmra.mxu0 %v488
          %v507 = vpop.f32.mrf.mxu0
          %v508 = vadd.f32 0.0, %v507
          %509 = vdwg.mxu0
          %v510 = vld [vmem:[#allocation2] sm:$0xff]
          %v511 = vld [vmem:[%s374] sm:$0x1]
          %v513 = vperm.slane %v511, 0
          %v515 = vadd.f32 %v510, %v513
          %v516 = vadd.f32 %v515, %v508
          %517 = vst.msk [vmem:[%s355] sm:$0xff] %vm405, %v516
        $region64: #{multi_lora_forward.1} parent=39 // pred_fallthru
          _
        %s518 = sand.u32 %s203, 1
        %s519 = scalar_lea.sflag [#allocation7], %s518
        %s520 = sand.u32 %s203, 1
        %s521 = smul.addr %s520, 8
        %s522 = scalar_lea.vmem [#allocation6], %s521
        // Predicated region
        $region65: #{multi_lora_forward.1} parent=39 // pred_check
          %p523 = pneg %p213
        $region66: #{multi_lora_forward.1} parent=39 // pred_check_branch
          %525 = sbr.rel (%p523) target = $region68
        $region67: #{multi_lora_forward.1} parent=39 // pred_region
          %527 = vsyncadd %s519, 0
          %s528 = sadd.s32 %s34, %s33
          %s529 = smul.addr %s528, 8
          %s530 = scalar_lea.hbm %s6, %s529
          %s532 = sshll.u32 %s522, 4
          %s533 = int_to_ptr.vmem [resolvable:$true] %s532
          %s534 = sshll.u32 %s530, 4
          %s535 = int_to_ptr.hbm [resolvable:$true] %s534
          %537 = dma.vmem_to_hbm [thread:$0]  %s533, 128, %s535, %s519
        $region68: #{multi_lora_forward.1} parent=39 // pred_fallthru
          _
      $region40: #{multi_lora_forward.1} parent=5 // pred_fallthru
        _
      %p538 = scmp.le.s32.totalorder 2, %s23
      // Predicated region
      $region69: #{multi_lora_forward.1} parent=5 // pred_check
        %p539 = pneg %p538
      $region70: #{multi_lora_forward.1} parent=5 // pred_check_branch
        %541 = sbr.rel (%p539) target = $region72
      $region71: #{multi_lora_forward.1} parent=5 // pred_region
        %s542 = ssub.s32 %s23, 2
        // Predicated region
        $region73: #{multi_lora_forward.1} parent=71 // pred_check
          %p543 = pneg %p219
        $region74: #{multi_lora_forward.1} parent=71 // pred_check_branch
          %545 = sbr.rel (%p543) target = $region76
        $region75: #{multi_lora_forward.1} parent=71 // pred_region
          %s546 = sand.u32 %s204, 1
          %s547 = scalar_lea.sflag [#allocation7], %s546
          %s548 = sand.u32 %s204, 1
          %s549 = smul.addr %s548, 8
          %s550 = scalar_lea.vmem [#allocation6], %s549
          %552 = dma.done %s547, 128
        $region76: #{multi_lora_forward.1} parent=71 // pred_fallthru
          _
      $region72: #{multi_lora_forward.1} parent=5 // pred_fallthru
        _
    $region6: #{multi_lora_forward.1} parent=1 // loop_footer
      %s27 = sadd.s32 1, %s23
    $region7: #{multi_lora_forward.1} parent=1 // loop_footer_branch
      %22 = sbr.rel target = $region3
    $region8: #{multi_lora_forward.1} parent=1 // loop_exit
      _
    %553 = vsyncpa [#allocation7], 1
    %s554 = scalar_lea.sflag [#allocation7], 1
    %555 = vsyncpa %s554, 1

</llo_original>
